<compile_context>
chip_gen: v6e
topology: v6e:2x2x1
jax: 0.10.0
libtpu: 0.0.40
codegen_flags: <defaults>
</compile_context>

<pallas_src>
import jax
import jax.numpy as jnp
from jax.experimental import pallas as pl
from jax.experimental.pallas import tpu as pltpu


def _attention_kernel(x_ref, w_ref, ws_ref, attn_ref):
    # x_ref:    (Bt, S, D) slab of lstm_out for the current batch tile
    # w_ref:    (1, D)     attention projection vector (Linear(2H -> 1), no bias)
    # ws_ref:   (Bt, D)    weighted-sum output
    # attn_ref: (Bt, S)    softmax attention weights output
    x = x_ref[...].astype(jnp.float32)              # (Bt, S, D)
    w = w_ref[...].astype(jnp.float32)              # (1, D)

    # Attention scores on the VPU + lane reduce (no MXU), kept in keepdims
    # (Bt, S, 1) layout so S stays on the sublane axis for the next broadcast.
    scores = jnp.sum(x * w[None, :, :], axis=-1, keepdims=True)     # (Bt, S, 1)

    # Numerically stable softmax over the sequence axis (axis=1 here).
    m = jnp.max(scores, axis=1, keepdims=True)                      # (Bt, 1, 1)
    e = jnp.exp(scores - m)                                         # (Bt, S, 1)
    denom = jnp.sum(e, axis=1, keepdims=True)                       # (Bt, 1, 1)
    inv = pl.reciprocal(denom, approx=False)                        # (Bt, 1, 1)

    # Deferred normalization: weighted sum of un-normalized exps, scaled once.
    # (Bt, S, D) * (Bt, S, 1) -> sum over S -> (Bt, D); e broadcast is lane-cheap.
    weighted = jnp.sum(x * e, axis=1) * inv[:, 0, :]                # (Bt, D)
    ws_ref[...] = weighted.astype(ws_ref.dtype)

    # Normalized attention weights; squeeze only for the small 2-D store.
    attn_ref[...] = (e * inv)[..., 0].astype(attn_ref.dtype)        # (Bt, S)


def _chip_info():
    """Best-effort (vmem_capacity_bytes, two_tensorcores) with safe fallbacks."""
    vmem_bytes = 128 << 20
    two_cores = False
    kind = ""
    try:
        kind = jax.devices()[0].device_kind.lower()
    except Exception:
        pass
    if "v7" in kind or "7x" in kind:
        vmem_bytes = 64 << 20
        two_cores = True
    try:
        info = pltpu.get_tpu_info()
        vmem_bytes = int(getattr(info, "vmem_capacity_bytes", vmem_bytes))
    except Exception:
        pass
    return vmem_bytes, two_cores


def _pick_batch_tile(B, S, D, *, vmem_bytes, two_cores):
    """Rows per grid step: a multiple of 8 (sublane rule) or the whole batch."""
    per_row_bytes = (S * D + D + S) * 4                 # f32 tile + outputs / row
    # Target per-tile budget (double-buffered): smaller on 64 MiB-VMEM parts.
    tile_budget = (12 << 20) if vmem_bytes <= (64 << 20) else (24 << 20)
    budget_rows = max(1, tile_budget // (2 * per_row_bytes))
    bt = min(B, budget_rows)
    if two_cores and B >= 16:
        # At least 2 grid steps so both TensorCores get work (v7x only).
        bt = min(bt, B // 2)
    if bt < B:
        bt = max(8, (bt // 8) * 8)                      # sublane-aligned blocks
        if two_cores:
            n = pl.cdiv(B, bt)
            if n > 1 and n % 2:                         # balance the two cores
                bt2 = (pl.cdiv(B, n + 1) // 8) * 8
                if bt2 >= 8:
                    bt = bt2
    return min(bt, B)


def attention_layer(lstm_out, attn_w, *, block_batch=None):
    """lstm_out: (B, S, D) float32/bfloat16; attn_w: (1, D) (Linear weight).

    Returns (weighted_sum (B, D), attention_weights (B, S)), dtype of lstm_out.
    """
    B, S, D = lstm_out.shape
    assert attn_w.shape == (1, D)

    vmem_bytes, two_cores = _chip_info()
    if block_batch is not None:
        bt = min(int(block_batch), B)
        if bt < B and bt % 8 != 0:
            raise ValueError("block_batch must be a multiple of 8 or >= batch")
    else:
        bt = _pick_batch_tile(B, S, D, vmem_bytes=vmem_bytes, two_cores=two_cores)
    grid = (pl.cdiv(B, bt),)

    # VMEM limit: double-buffered input/output tiles plus headroom for the f32
    # upcast copy and elementwise temporaries, capped per chip generation.
    in_itemsize = lstm_out.dtype.itemsize
    out_itemsize = in_itemsize
    f32_tile = bt * S * D * 4
    in_tile = bt * S * D * in_itemsize
    out_tiles = bt * (D + S) * out_itemsize
    vmem_need = 2 * (in_tile + out_tiles) + 3 * f32_tile + 2 * D * 4
    soft_cap = (40 << 20) if vmem_bytes <= (64 << 20) else (64 << 20)
    hard_cap = max(soft_cap, vmem_bytes - (16 << 20))
    vmem_limit = int(min(max(vmem_need + (2 << 20), 16 << 20), soft_cap))
    if vmem_need + (2 << 20) > soft_cap:
        vmem_limit = int(min(vmem_need + (2 << 20), hard_cap))

    grid_spec = pltpu.PrefetchScalarGridSpec(
        num_scalar_prefetch=0,
        grid=grid,
        in_specs=[
            pl.BlockSpec((bt, S, D), lambda b: (b, 0, 0)),   # lstm_out slab
            pl.BlockSpec((1, D), lambda b: (0, 0)),          # weight, replicated
        ],
        out_specs=[
            pl.BlockSpec((bt, D), lambda b: (b, 0)),         # weighted_sum
            pl.BlockSpec((bt, S), lambda b: (b, 0)),         # attention weights
        ],
    )

    return pl.pallas_call(
        _attention_kernel,
        out_shape=(
            jax.ShapeDtypeStruct((B, D), lstm_out.dtype),
            jax.ShapeDtypeStruct((B, S), lstm_out.dtype),
        ),
        grid_spec=grid_spec,
        compiler_params=pltpu.CompilerParams(
            dimension_semantics=("parallel",),
            vmem_limit_bytes=vmem_limit,
        ),
    )(lstm_out, attn_w)


def _reference(lstm_out, attn_w):
    scores = jnp.einsum("bsd,d->bs", lstm_out, attn_w[0])
    weights = jax.nn.softmax(scores, axis=1)
    weighted = jnp.sum(lstm_out * weights[..., None], axis=1)
    return weighted, weights


if __name__ == "__main__":
    # Small shapes consistent with the module: batch=2, seq=8, hidden_dim=32
    # => lstm_out feature dim = 2*hidden_dim = 64.
    B, S, H = 2, 8, 32
    D = 2 * H

    key = jax.random.PRNGKey(0)
    k_x, k_w = jax.random.split(key)
    lstm_out = jax.random.normal(k_x, (B, S, D), dtype=jnp.float32)
    # Deterministic init of nn.Linear(hidden_dim*2, 1, bias=False) weight: (1, D)
    attn_w = (jax.random.uniform(k_w, (1, D), dtype=jnp.float32) - 0.5) * (2.0 / jnp.sqrt(D))

    weighted, weights = attention_layer(lstm_out, attn_w)
    jax.block_until_ready((weighted, weights))

    ref_weighted, ref_weights = _reference(lstm_out, attn_w)
    assert weighted.shape == (B, D) and weights.shape == (B, S)
    assert jnp.allclose(weighted, ref_weighted, atol=1e-5, rtol=1e-5)
    assert jnp.allclose(weights, ref_weights, atol=1e-5, rtol=1e-5)

    print("KERNEL_OK")
</pallas_src>

<mosaic_0001>
module attributes {stable_mosaic.version = 11 : i64} {
  func.func @_attention_kernel(%arg0: i32, %arg1: memref<2x8x64xf32, #tpu.memory_space<vmem>>, %arg2: memref<1x64xf32, #tpu.memory_space<vmem>>, %arg3: memref<2x64xf32, #tpu.memory_space<vmem>>, %arg4: memref<2x8xf32, #tpu.memory_space<vmem>>) attributes {dimension_semantics = [#tpu.dimension_semantics<parallel>], iteration_bounds = array<i64: 1>, scalar_prefetch = 0 : i64, scratch_operands = 0 : i64, tpu.core_type = #tpu.core_type<tc>, window_params = [{transform_indices = @transform_0, window_bounds = array<i64: 2, 8, 64>}, {pipeline_mode = #tpu.pipeline_mode<synchronous>, transform_indices = @transform_1, window_bounds = array<i64: 1, 64>}, {transform_indices = @transform_2, window_bounds = array<i64: 2, 64>}, {transform_indices = @transform_3, window_bounds = array<i64: 2, 8>}]} {
    %c0 = arith.constant 0 : index
    %c0_0 = arith.constant 0 : index
    %c0_1 = arith.constant 0 : index
    %0 = vector.load %arg1[%c0, %c0_0, %c0_1] : memref<2x8x64xf32, #tpu.memory_space<vmem>>, vector<2x8x64xf32>
    %c0_2 = arith.constant 0 : index
    %c0_3 = arith.constant 0 : index
    %1 = vector.load %arg2[%c0_2, %c0_3] : memref<1x64xf32, #tpu.memory_space<vmem>>, vector<1x64xf32>
    %2 = vector.shape_cast %1 : vector<1x64xf32> to vector<1x1x64xf32>
    %3 = vector.broadcast %2 : vector<1x1x64xf32> to vector<2x8x64xf32>
    %4 = arith.mulf %0, %3 : vector<2x8x64xf32>
    %cst = arith.constant dense<0.000000e+00> : vector<2x8xf32>
    %5 = vector.multi_reduction <add>, %4, %cst [2] : vector<2x8x64xf32> to vector<2x8xf32>
    %6 = vector.shape_cast %5 : vector<2x8xf32> to vector<2x8x1xf32>
    %cst_4 = arith.constant dense<0xFF800000> : vector<2x1xf32>
    %7 = vector.multi_reduction <maximumf>, %6, %cst_4 [1] : vector<2x8x1xf32> to vector<2x1xf32>
    %8 = vector.shape_cast %7 : vector<2x1xf32> to vector<2x1x1xf32>
    %9 = vector.broadcast %8 : vector<2x1x1xf32> to vector<2x8x1xf32>
    %10 = arith.subf %6, %9 : vector<2x8x1xf32>
    %11 = math.exp %10 : vector<2x8x1xf32>
    %cst_5 = arith.constant dense<0.000000e+00> : vector<2x1xf32>
    %12 = vector.multi_reduction <add>, %11, %cst_5 [1] : vector<2x8x1xf32> to vector<2x1xf32>
    %13 = vector.shape_cast %12 : vector<2x1xf32> to vector<2x1x1xf32>
    %14 = tpu.reciprocal %13 : vector<2x1x1xf32> -> vector<2x1x1xf32>
    %15 = vector.broadcast %11 : vector<2x8x1xf32> to vector<2x8x64xf32>
    %16 = arith.mulf %0, %15 : vector<2x8x64xf32>
    %cst_6 = arith.constant dense<0.000000e+00> : vector<2x64xf32>
    %17 = vector.multi_reduction <add>, %16, %cst_6 [1] : vector<2x8x64xf32> to vector<2x64xf32>
    %18 = vector.shape_cast %14 : vector<2x1x1xf32> to vector<2x1xf32>
    %19 = vector.broadcast %18 : vector<2x1xf32> to vector<2x64xf32>
    %20 = arith.mulf %17, %19 : vector<2x64xf32>
    %c0_7 = arith.constant 0 : index
    %c0_8 = arith.constant 0 : index
    %21 = vector.load %arg3[%c0_7, %c0_8] : memref<2x64xf32, #tpu.memory_space<vmem>>, vector<2x64xf32>
    tpu.vector_store %arg3[%c0_7, %c0_8], %20 {strides = array<i32>} : memref<2x64xf32, #tpu.memory_space<vmem>>, vector<2x64xf32>,
    %22 = vector.broadcast %14 : vector<2x1x1xf32> to vector<2x8x1xf32>
    %23 = arith.mulf %11, %22 : vector<2x8x1xf32>
    %24 = vector.shape_cast %23 : vector<2x8x1xf32> to vector<2x8xf32>
    %c0_9 = arith.constant 0 : index
    %c0_10 = arith.constant 0 : index
    %25 = vector.load %arg4[%c0_9, %c0_10] : memref<2x8xf32, #tpu.memory_space<vmem>>, vector<2x8xf32>
    tpu.vector_store %arg4[%c0_9, %c0_10], %24 {strides = array<i32>} : memref<2x8xf32, #tpu.memory_space<vmem>>, vector<2x8xf32>,
    return
  }
  func.func @transform_0(%arg0: i32) -> (i32, i32, i32) {
    %c0_i32 = arith.constant 0 : i32
    %c0_i32_0 = arith.constant 0 : i32
    %c0_i32_1 = arith.constant 0 : i32
    return %arg0, %c0_i32, %c0_i32_0 : i32, i32, i32
  }
  func.func @transform_1(%arg0: i32) -> (i32, i32) {
    %c0_i32 = arith.constant 0 : i32
    %c0_i32_0 = arith.constant 0 : i32
    %c0_i32_1 = arith.constant 0 : i32
    return %c0_i32, %c0_i32_0 : i32, i32
  }
  func.func @transform_2(%arg0: i32) -> (i32, i32) {
    %c0_i32 = arith.constant 0 : i32
    %c0_i32_0 = arith.constant 0 : i32
    return %arg0, %c0_i32 : i32, i32
  }
  func.func @transform_3(%arg0: i32) -> (i32, i32) {
    %c0_i32 = arith.constant 0 : i32
    %c0_i32_0 = arith.constant 0 : i32
    return %arg0, %c0_i32 : i32, i32
  }
}

</mosaic_0001>

<llo_original>
// kernel: tpu_custom_call.1
$region0: #{tpu_custom_call.1}
  #allocation0 [shape = 'u32[]', space=smem, size = 0x4, offset = 0x4, fixed_abs, tag = 'smem constant byte address 0x4 - core index']
  #allocation1 [shape = 'u32[144,128]{1,0:T(1,128)}', space=vmem, size = 0x12000, scoped, tag = 'internal scratch']
  %s0 = inlined_call_operand.hbm [shape: f32[2,8,64], index: 0, kind: input, shape index: {}]
  %s1 = inlined_call_operand.vmem [shape: f32[1,64], index: 1, kind: input, shape index: {}]
  %s2 = inlined_call_operand.hbm [shape: f32[2,64], index: 2, kind: output, shape index: {0}]
  %s3 = inlined_call_operand.hbm [shape: f32[2,8], index: 3, kind: output, shape index: {1}]
  %4 = xla_tuple %s2, %s3
  %s5 = sld [smem:[#allocation0]]
  $region30: #{tpu_custom_call.1} parent=0
    _
  %s7 = ssub.s32 1, %s5
  %s8 = scalar_select 0, %s7, %s5
  $region1: #{tpu_custom_call.1} parent=0
    #allocation2 [shape = 'u8[8192]{0}', space=vmem, size = 0x2000, scoped, tag = 'input window, operand 0, single buffered']
    #allocation3 [shape = 's32[1]{0}', space=sflag, size = 0x4, scoped, tag = 'scoped memory for tpu_custom_call.1']
    #allocation4 [shape = 's32[1]{0}', space=sflag, size = 0x4, scoped, tag = 'scoped memory for tpu_custom_call.1']
    #allocation5 [shape = 'u8[1024]{0}', space=vmem, size = 0x400, scoped, tag = 'output window, operand 0, single buffered']
    #allocation6 [shape = 'u8[1024]{0}', space=vmem, size = 0x400, scoped, tag = 'output window, operand 1, single buffered']
    #allocation7 [shape = 's32[1]{0}', space=sflag, size = 0x4, scoped, tag = 'scoped memory for tpu_custom_call.1']
    %9 = vsyncpa [#allocation3], 0
    %10 = vsyncpa [#allocation4], 0
    %11 = vsyncpa [#allocation7], 0
    // Predicated region
    $region2: #{tpu_custom_call.1} parent=1 // pred_check
      _
    $region3: #{tpu_custom_call.1} parent=1 // pred_check_branch
      %13 = sbr.rel (0) target = $region5
    $region4: #{tpu_custom_call.1} parent=1 // pred_region
      %s15 = ssub.s32 256, 256
      %16 = vsyncadd [#allocation3], %s15
      %s17 = sshll.u32 [#allocation2], 4
      %s18 = int_to_ptr.vmem [resolvable:$true] %s17
      %23 = dma.hbm_to_vmem [thread:$0]  %s0, 256, %s18, [#allocation3], 128, 128, 8
    $region5: #{tpu_custom_call.1} parent=1 // pred_fallthru
      _
    // Predicated region
    $region6: #{tpu_custom_call.1} parent=1 // pred_check
      _
    $region7: #{tpu_custom_call.1} parent=1 // pred_check_branch
      %25 = sbr.rel (0) target = $region9
    $region8: #{tpu_custom_call.1} parent=1 // pred_region
      _
    $region9: #{tpu_custom_call.1} parent=1 // pred_fallthru
      _
    // Predicated region
    $region10: #{tpu_custom_call.1} parent=1 // pred_check
      _
    $region11: #{tpu_custom_call.1} parent=1 // pred_check_branch
      %27 = sbr.rel (0) target = $region13
    $region12: #{tpu_custom_call.1} parent=1 // pred_region
      %28 = dma.done [#allocation3], 256
    $region13: #{tpu_custom_call.1} parent=1 // pred_fallthru
      _
    %v29 = vld [vmem:[#allocation2] sm:$0xff]
    %v30 = vld [vmem:[#allocation2 + $0x8] sm:$0xff]
    %v31 = vld [vmem:[%s1] sm:$0x1]
    %v33 = vlaneseq
    %v34 = vshrl.u32 %v33, 7
    %v35 = vsub.s32 0, %v34
    %v36 = vrot.slane %v31, %v35
    %v38 = vmul.f32 %v29, %v36
    %v39 = vmul.f32 %v30, %v36
    %vm40 = vcmask 523264
    %v41 = vsel %vm40, %v38, 0.0
    %42 = vadd.xlane.f32.xlu0 %v41
    %v43 = vpop.xlane.xlu0 %42
    %v44 = vsel %vm40, %v39, 0.0
    %45 = vadd.xlane.f32.xlu0 %v44
    %v46 = vpop.xlane.xlu0 %45
    %v47 = vrot.slane %v43, 4
    %v48 = vmax.f32 %v43, %v47
    %v49 = vrot.slane %v48, 2
    %v50 = vmax.f32 %v48, %v49
    %v51 = vrot.slane %v50, 1
    %v52 = vmax.f32 %v50, %v51
    %v53 = vrot.slane %v46, 4
    %v54 = vmax.f32 %v46, %v53
    %v55 = vrot.slane %v54, 2
    %v56 = vmax.f32 %v54, %v55
    %v57 = vrot.slane %v56, 1
    %v58 = vmax.f32 %v56, %v57
    %v59 = vsub.f32 %v43, %v52
    %v60 = vsub.f32 %v46, %v58
    %v61 = vmul.f32 %v59, 1.442695
    %v62 = vpow.pop %v61
    %v63 = vmul.f32 %v60, 1.442695
    %v64 = vpow.pop %v63
    %v65 = vrot.slane %v62, 4
    %v66 = vadd.f32 %v62, %v65
    %v67 = vrot.slane %v66, 2
    %v68 = vadd.f32 %v66, %v67
    %v69 = vrot.slane %v68, 1
    %v70 = vadd.f32 %v68, %v69
    %v71 = vrot.slane %v64, 4
    %v72 = vadd.f32 %v64, %v71
    %v73 = vrot.slane %v72, 2
    %v74 = vadd.f32 %v72, %v73
    %v75 = vrot.slane %v74, 1
    %v76 = vadd.f32 %v74, %v75
    %v77 = vrcp.pop %v70
    %v78 = vrcp.pop %v76
    %v79 = vmul.f32 %v29, %v62
    %v80 = vmul.f32 %v30, %v64
    %v81 = vsel %vm40, %v79, 0.0
    %v82 = vrot.slane %v81, 4
    %v83 = vadd.f32 %v81, %v82
    %v84 = vrot.slane %v83, 2
    %v85 = vadd.f32 %v83, %v84
    %v86 = vrot.slane %v85, 1
    %v87 = vadd.f32 %v85, %v86
    %v88 = vsel %vm40, %v80, 0.0
    %v89 = vrot.slane %v88, 4
    %v90 = vadd.f32 %v88, %v89
    %v91 = vrot.slane %v90, 2
    %v92 = vadd.f32 %v90, %v91
    %v93 = vrot.slane %v92, 1
    %v94 = vadd.f32 %v92, %v93
    %v95 = vmul.f32 %v87, %v77
    %v96 = vmul.f32 %v94, %v78
    %vm99 = vcmask 1041409
    %v100 = vsel %vm99, %v96, %v95
    %vm102 = vcmask 517120
    %103 = vst.msk [vmem:[#allocation5] sm:$0x3] %vm102, %v100
    %v104 = vmul.f32 %v62, %v77
    %v105 = vmul.f32 %v64, %v78
    %v108 = vlaneseq
    %v109 = vand.u32 %v108, 127
    %v110 = vlaneseq
    %v111 = vshrl.u32 %v110, 7
    %v112 = vsub.s32 %v109, %v111
    %v113 = vrot.slane %v104, %v112
    %v114 = vlaneseq
    %v115 = vshrl.u32 %v114, 7
    %v116 = vsub.s32 %v109, %v115
    %v117 = vrot.slane %v105, %v116
    %v118 = vsel %vm99, %v117, %v113
    %vm120 = vcmask 58368
    %121 = vst.msk [vmem:[#allocation6] sm:$0x3] %vm120, %v118
    // Predicated region
    $region14: #{tpu_custom_call.1} parent=1 // pred_check
      _
    $region15: #{tpu_custom_call.1} parent=1 // pred_check_branch
      %123 = sbr.rel (0) target = $region17
    $region16: #{tpu_custom_call.1} parent=1 // pred_region
      %s125 = ssub.s32 32, 32
      %126 = vsyncadd [#allocation4], %s125
      %s128 = sshll.u32 [#allocation5], 4
      %s129 = int_to_ptr.vmem [resolvable:$true] %s128
      %131 = dma.vmem_to_hbm [thread:$0]  %s129, 32, %s2, [#allocation4]
    $region17: #{tpu_custom_call.1} parent=1 // pred_fallthru
      _
    // Predicated region
    $region18: #{tpu_custom_call.1} parent=1 // pred_check
      _
    $region19: #{tpu_custom_call.1} parent=1 // pred_check_branch
      %133 = sbr.rel (0) target = $region21
    $region20: #{tpu_custom_call.1} parent=1 // pred_region
      %s135 = ssub.s32 32, 32
      %136 = vsyncadd [#allocation7], %s135
      %s138 = sshll.u32 [#allocation6], 4
      %s139 = int_to_ptr.vmem [resolvable:$true] %s138
      %141 = dma.vmem_to_hbm [thread:$0]  %s139, 32, %s3, [#allocation7]
    $region21: #{tpu_custom_call.1} parent=1 // pred_fallthru
      _
    // Predicated region
    $region22: #{tpu_custom_call.1} parent=1 // pred_check
      _
    $region23: #{tpu_custom_call.1} parent=1 // pred_check_branch
      %143 = sbr.rel (0) target = $region25
    $region24: #{tpu_custom_call.1} parent=1 // pred_region
      %144 = dma.done [#allocation4], 32
    $region25: #{tpu_custom_call.1} parent=1 // pred_fallthru
      _
    // Predicated region
    $region26: #{tpu_custom_call.1} parent=1 // pred_check
      _
    $region27: #{tpu_custom_call.1} parent=1 // pred_check_branch
      %146 = sbr.rel (0) target = $region29
    $region28: #{tpu_custom_call.1} parent=1 // pred_region
      %147 = dma.done [#allocation7], 32
    $region29: #{tpu_custom_call.1} parent=1 // pred_fallthru
      _
    %148 = vsyncpa [#allocation3], 1
    %149 = vsyncpa [#allocation4], 1
    %150 = vsyncpa [#allocation7], 1

</llo_original>
